<compile_context>
chip_gen: v5e
topology: v5e:2x2
jax: 0.10.0
libtpu: 0.0.40
codegen_flags: <defaults>
</compile_context>

<pallas_src>
import functools

import jax
import jax.numpy as jnp
from jax.experimental import pallas as pl
from jax.experimental.pallas import tpu as pltpu

EPS = 1e-5


# --------------------------------------------------------------------------
# Fused SPC kernel: conv1x9+BN+SiLU -> conv9x1+BN+SiLU -> concat+1x1conv+BN+SiLU
# --------------------------------------------------------------------------
def _spc_fused_kernel(x_ref, w1_ref, b1_ref, w2_ref, b2_ref, wc_ref, b3_ref,
                      o_ref, *, w_img):
    # x_ref : (1, C, H*W)   channels on sublanes, pixels (lane-dense) on lanes
    # w1/w2 : (C, 9*C)      BN-scale-folded conv taps, layout (out_ch, tap*in_ch)
    # wc    : (Cout, 2*C)   BN-scale-folded 1x1-conv weight (identity | conv)
    # b*    : (*, 1)        per-channel folded-BN bias columns
    # o_ref : (1, Cout, H*W)
    npix = x_ref.shape[2]
    x = x_ref[0].astype(jnp.float32)                       # (C, P) identity path

    w_pos = jax.lax.broadcasted_iota(jnp.int32, (1, npix), 1) % w_img

    def im2col_9tap(v, stride, mask_coord=None, limit=0):
        # Stack the 9 shifted copies of v on the sublane axis -> a single
        # (9C, P) slab, so the whole 9-tap conv is ONE MXU matmul.
        cc, pp = v.shape
        halo = 4 * stride
        zpad = jnp.zeros((cc, halo), v.dtype)
        vp = jnp.concatenate([zpad, v, zpad], axis=1)      # (C, P + 8*stride)
        taps = []
        for j in range(9):                                  # static unroll
            win = vp[:, j * stride:j * stride + pp]        # shift by (j-4)*stride
            if mask_coord is not None and j != 4:
                d = j - 4
                ok = (mask_coord + d >= 0) & (mask_coord + d < limit)
                win = jnp.where(ok, win, 0.0)
            taps.append(win)
        return jnp.concatenate(taps, axis=0)               # (9C, P)

    def silu(v):
        # v * sigmoid(v); divide replaced by EUP reciprocal estimate + one
        # Newton step (keeps f32-level accuracy, no VALU divide).
        a = 1.0 + jnp.exp(jnp.minimum(-v, 80.0))
        r = pl.reciprocal(a, approx=True)
        r = r * (2.0 - a * r)
        return v * r

    # conv 1x9 along W (lane-position mask handles the flattened-row halo)
    y = jnp.dot(w1_ref[...], im2col_9tap(x, 1, w_pos, w_img),
                preferred_element_type=jnp.float32) + b1_ref[...]
    y = silu(y)

    # conv 9x1 along H (stride-W windows into the zero-padded slab give the
    # exact 'same' padding — no mask needed)
    y = jnp.dot(w2_ref[...], im2col_9tap(y, w_img),
                preferred_element_type=jnp.float32) + b2_ref[...]
    y = silu(y)

    # CBS: concat(identity, conv path) on sublanes + 1x1 conv + BN + SiLU
    z = jnp.dot(wc_ref[...], jnp.concatenate([x, y], axis=0),
                preferred_element_type=jnp.float32) + b3_ref[...]
    z = silu(z)

    o_ref[0] = z.astype(o_ref.dtype)                       # lane-dense store


# --------------------------------------------------------------------------
# Wrapper: fold BN scales into weights, flatten (H, W) onto lanes, call kernel
# --------------------------------------------------------------------------
def spc_forward(x_nchw, p):
    n, c, h, w = x_nchw.shape
    c_out = p["wc"].shape[1]

    # NCHW stays in place: just flatten (H, W) onto the lane axis.
    x_flat = x_nchw.reshape(n, c, h * w)

    # Fold BN scales into the transposed matmul weights (tiny, done per call).
    w1t = p["w1"].reshape(9 * c, c).T * p["s1"].reshape(c, 1)      # (C, 9C)
    w2t = p["w2"].reshape(9 * c, c).T * p["s2"].reshape(c, 1)      # (C, 9C)
    wct = p["wc"].T * p["s3"].reshape(c_out, 1)                    # (Cout, 2C)
    b1 = p["b1"].reshape(c, 1)
    b2 = p["b2"].reshape(c, 1)
    b3 = p["b3"].reshape(c_out, 1)

    out_flat = pl.pallas_call(
        functools.partial(_spc_fused_kernel, w_img=w),
        out_shape=jax.ShapeDtypeStruct((n, c_out, h * w), x_nchw.dtype),
        grid=(n,),                                         # >=2 steps: shards across v7x's 2 TCs
        in_specs=[
            pl.BlockSpec((1, c, h * w), lambda i: (i, 0, 0)),
            pl.BlockSpec((c, 9 * c), lambda i: (0, 0)),
            pl.BlockSpec((c, 1), lambda i: (0, 0)),
            pl.BlockSpec((c, 9 * c), lambda i: (0, 0)),
            pl.BlockSpec((c, 1), lambda i: (0, 0)),
            pl.BlockSpec((c_out, 2 * c), lambda i: (0, 0)),
            pl.BlockSpec((c_out, 1), lambda i: (0, 0)),
        ],
        out_specs=pl.BlockSpec((1, c_out, h * w), lambda i: (i, 0, 0)),
        compiler_params=pltpu.CompilerParams(
            dimension_semantics=("parallel",)),
    )(x_flat, w1t, b1, w2t, b2, wct, b3)

    return out_flat.reshape(n, c_out, h, w)                # already NCHW


# --------------------------------------------------------------------------
# Deterministic synthetic parameters (folded inference-mode BN)
# --------------------------------------------------------------------------
def _bn_fold(key, ch):
    kg, kb, km, kv = jax.random.split(key, 4)
    gamma = jax.random.uniform(kg, (1, ch), jnp.float32, 0.5, 1.5)
    beta = 0.1 * jax.random.normal(kb, (1, ch), jnp.float32)
    mean = 0.1 * jax.random.normal(km, (1, ch), jnp.float32)
    var = jax.random.uniform(kv, (1, ch), jnp.float32, 0.5, 1.5)
    scale = gamma / jnp.sqrt(var + EPS)
    bias = beta - mean * scale
    return scale, bias


def init_params(key, c_in, c_out):
    k1, k2, k3, kb1, kb2, kb3 = jax.random.split(key, 6)
    w1 = 0.1 * jax.random.normal(k1, (9, c_in, c_in), jnp.float32)   # taps, Cin, Cout
    w2 = 0.1 * jax.random.normal(k2, (9, c_in, c_in), jnp.float32)
    wc = 0.1 * jax.random.normal(k3, (2 * c_in, c_out), jnp.float32)  # 1x1 conv weight
    s1, b1 = _bn_fold(kb1, c_in)
    s2, b2 = _bn_fold(kb2, c_in)
    s3, b3 = _bn_fold(kb3, c_out)
    return {"w1": w1, "w2": w2, "wc": wc,
            "s1": s1, "b1": b1, "s2": s2, "b2": b2, "s3": s3, "b3": b3}


# --------------------------------------------------------------------------
# Pure-JAX reference (independent check via lax.conv_general_dilated)
# --------------------------------------------------------------------------
def spc_reference(x_nchw, p):
    x = jnp.transpose(x_nchw, (0, 2, 3, 1))                # NHWC
    dn = ("NHWC", "HWIO", "NHWC")
    y = jax.lax.conv_general_dilated(x, p["w1"][None], (1, 1),
                                     ((0, 0), (4, 4)), dimension_numbers=dn)
    y = y * p["s1"] + p["b1"]
    y = y * jax.nn.sigmoid(y)
    y = jax.lax.conv_general_dilated(y, p["w2"][:, None], (1, 1),
                                     ((4, 4), (0, 0)), dimension_numbers=dn)
    y = y * p["s2"] + p["b2"]
    y = y * jax.nn.sigmoid(y)
    comb = jnp.concatenate([x, y], axis=-1)
    z = comb @ p["wc"]
    z = z * p["s3"] + p["b3"]
    z = z * jax.nn.sigmoid(z)
    return jnp.transpose(z, (0, 3, 1, 2))


if __name__ == "__main__":
    key = jax.random.PRNGKey(0)
    k_x, k_p = jax.random.split(key)
    N, C_IN, H, W = 2, 8, 16, 16
    C_OUT = 16

    x = jax.random.normal(k_x, (N, C_IN, H, W), jnp.float32)
    params = init_params(k_p, C_IN, C_OUT)

    out = jax.jit(spc_forward)(x, params)
    out = jax.block_until_ready(out)

    assert out.shape == (N, C_OUT, H, W), out.shape
    ref = spc_reference(x, params)
    assert jnp.allclose(out, ref, atol=2e-3, rtol=2e-3), \
        float(jnp.max(jnp.abs(out - ref)))

    print("KERNEL_OK")
</pallas_src>

<mosaic_0001>
module attributes {stable_mosaic.version = 11 : i64} {
  func.func @_spc_fused_kernel(%arg0: i32, %arg1: memref<1x8x256xf32, #tpu.memory_space<vmem>>, %arg2: memref<8x72xf32, #tpu.memory_space<vmem>>, %arg3: memref<8x1xf32, #tpu.memory_space<vmem>>, %arg4: memref<8x72xf32, #tpu.memory_space<vmem>>, %arg5: memref<8x1xf32, #tpu.memory_space<vmem>>, %arg6: memref<16x16xf32, #tpu.memory_space<vmem>>, %arg7: memref<16x1xf32, #tpu.memory_space<vmem>>, %arg8: memref<1x16x256xf32, #tpu.memory_space<vmem>>) attributes {dimension_semantics = [#tpu.dimension_semantics<parallel>], iteration_bounds = array<i64: 2>, scalar_prefetch = 0 : i64, scratch_operands = 0 : i64, tpu.core_type = #tpu.core_type<tc>, window_params = [{transform_indices = @transform_0, window_bounds = array<i64: 1, 8, 256>}, {pipeline_mode = #tpu.pipeline_mode<synchronous>, transform_indices = @transform_1, window_bounds = array<i64: 8, 72>}, {pipeline_mode = #tpu.pipeline_mode<synchronous>, transform_indices = @transform_2, window_bounds = array<i64: 8, 1>}, {pipeline_mode = #tpu.pipeline_mode<synchronous>, transform_indices = @transform_3, window_bounds = array<i64: 8, 72>}, {pipeline_mode = #tpu.pipeline_mode<synchronous>, transform_indices = @transform_4, window_bounds = array<i64: 8, 1>}, {pipeline_mode = #tpu.pipeline_mode<synchronous>, transform_indices = @transform_5, window_bounds = array<i64: 16, 16>}, {pipeline_mode = #tpu.pipeline_mode<synchronous>, transform_indices = @transform_6, window_bounds = array<i64: 16, 1>}, {transform_indices = @transform_7, window_bounds = array<i64: 1, 16, 256>}]} {
    %c0 = arith.constant 0 : index
    %c0_0 = arith.constant 0 : index
    %c0_1 = arith.constant 0 : index
    %0 = vector.load %arg1[%c0, %c0_0, %c0_1] : memref<1x8x256xf32, #tpu.memory_space<vmem>>, vector<1x8x256xf32>
    %1 = vector.shape_cast %0 : vector<1x8x256xf32> to vector<8x256xf32>
    %2 = tpu.iota {dimensions = array<i32: 1>} : vector<1x256xi32>
    %c16_i32 = arith.constant 16 : i32
    %c0_i32 = arith.constant 0 : i32
    %3 = arith.cmpi eq, %c16_i32, %c0_i32 : i32
    %c1_i32 = arith.constant 1 : i32
    %4 = arith.select %3, %c1_i32, %c16_i32 : i32
    %5 = vector.broadcast %4 : i32 to vector<1x256xi32>
    %6 = arith.remsi %2, %5 : vector<1x256xi32>
    %c0_i32_2 = arith.constant 0 : i32
    %7 = vector.broadcast %c0_i32_2 : i32 to vector<1x256xi32>
    %8 = arith.cmpi ne, %6, %7 : vector<1x256xi32>
    %c0_i32_3 = arith.constant 0 : i32
    %9 = vector.broadcast %c0_i32_3 : i32 to vector<1x256xi32>
    %10 = arith.cmpi slt, %6, %9 : vector<1x256xi32>
    %c0_i32_4 = arith.constant 0 : i32
    %11 = arith.cmpi slt, %4, %c0_i32_4 : i32
    %12 = vector.broadcast %11 : i1 to vector<1x256xi1>
    %13 = vector.broadcast %12 : vector<1x256xi1> to vector<1x256xi1>
    %14 = arith.xori %10, %13 : vector<1x256xi1>
    %15 = arith.andi %14, %8 : vector<1x256xi1>
    %16 = vector.broadcast %4 : i32 to vector<1x256xi32>
    %17 = arith.addi %6, %16 : vector<1x256xi32>
    %18 = arith.select %15, %17, %6 : vector<1x256xi1>, vector<1x256xi32>
    %c0_5 = arith.constant 0 : index
    %c0_6 = arith.constant 0 : index
    %19 = vector.load %arg2[%c0_5, %c0_6] : memref<8x72xf32, #tpu.memory_space<vmem>>, vector<8x72xf32>
    %cst = arith.constant 0.000000e+00 : f32
    %20 = vector.broadcast %cst : f32 to vector<8x4xf32>
    %21 = tpu.concatenate %20, %1, %20 in 1 : vector<8x4xf32>, vector<8x256xf32>, vector<8x4xf32> -> vector<8x264xf32>
    %22 = vector.extract_strided_slice %21 {offsets = [0, 0], sizes = [8, 256], strides = [1, 1]} : vector<8x264xf32> to vector<8x256xf32>
    %c-4_i32 = arith.constant -4 : i32
    %23 = vector.broadcast %c-4_i32 : i32 to vector<1x256xi32>
    %24 = arith.addi %18, %23 : vector<1x256xi32>
    %c0_i32_7 = arith.constant 0 : i32
    %25 = vector.broadcast %c0_i32_7 : i32 to vector<1x256xi32>
    %26 = arith.cmpi sge, %24, %25 : vector<1x256xi32>
    %c-4_i32_8 = arith.constant -4 : i32
    %27 = vector.broadcast %c-4_i32_8 : i32 to vector<1x256xi32>
    %28 = arith.addi %18, %27 : vector<1x256xi32>
    %c16_i32_9 = arith.constant 16 : i32
    %29 = vector.broadcast %c16_i32_9 : i32 to vector<1x256xi32>
    %30 = arith.cmpi slt, %28, %29 : vector<1x256xi32>
    %31 = arith.andi %26, %30 : vector<1x256xi1>
    %cst_10 = arith.constant 0.000000e+00 : f32
    %32 = vector.shape_cast %31 : vector<1x256xi1> to vector<1x256xi1>
    %33 = vector.broadcast %32 : vector<1x256xi1> to vector<8x256xi1>
    %34 = vector.broadcast %cst_10 : f32 to vector<8x256xf32>
    %35 = arith.select %33, %22, %34 : vector<8x256xi1>, vector<8x256xf32>
    %36 = vector.extract_strided_slice %21 {offsets = [0, 1], sizes = [8, 256], strides = [1, 1]} : vector<8x264xf32> to vector<8x256xf32>
    %c-3_i32 = arith.constant -3 : i32
    %37 = vector.broadcast %c-3_i32 : i32 to vector<1x256xi32>
    %38 = arith.addi %18, %37 : vector<1x256xi32>
    %c0_i32_11 = arith.constant 0 : i32
    %39 = vector.broadcast %c0_i32_11 : i32 to vector<1x256xi32>
    %40 = arith.cmpi sge, %38, %39 : vector<1x256xi32>
    %c-3_i32_12 = arith.constant -3 : i32
    %41 = vector.broadcast %c-3_i32_12 : i32 to vector<1x256xi32>
    %42 = arith.addi %18, %41 : vector<1x256xi32>
    %c16_i32_13 = arith.constant 16 : i32
    %43 = vector.broadcast %c16_i32_13 : i32 to vector<1x256xi32>
    %44 = arith.cmpi slt, %42, %43 : vector<1x256xi32>
    %45 = arith.andi %40, %44 : vector<1x256xi1>
    %cst_14 = arith.constant 0.000000e+00 : f32
    %46 = vector.shape_cast %45 : vector<1x256xi1> to vector<1x256xi1>
    %47 = vector.broadcast %46 : vector<1x256xi1> to vector<8x256xi1>
    %48 = vector.broadcast %cst_14 : f32 to vector<8x256xf32>
    %49 = arith.select %47, %36, %48 : vector<8x256xi1>, vector<8x256xf32>
    %50 = vector.extract_strided_slice %21 {offsets = [0, 2], sizes = [8, 256], strides = [1, 1]} : vector<8x264xf32> to vector<8x256xf32>
    %c-2_i32 = arith.constant -2 : i32
    %51 = vector.broadcast %c-2_i32 : i32 to vector<1x256xi32>
    %52 = arith.addi %18, %51 : vector<1x256xi32>
    %c0_i32_15 = arith.constant 0 : i32
    %53 = vector.broadcast %c0_i32_15 : i32 to vector<1x256xi32>
    %54 = arith.cmpi sge, %52, %53 : vector<1x256xi32>
    %c-2_i32_16 = arith.constant -2 : i32
    %55 = vector.broadcast %c-2_i32_16 : i32 to vector<1x256xi32>
    %56 = arith.addi %18, %55 : vector<1x256xi32>
    %c16_i32_17 = arith.constant 16 : i32
    %57 = vector.broadcast %c16_i32_17 : i32 to vector<1x256xi32>
    %58 = arith.cmpi slt, %56, %57 : vector<1x256xi32>
    %59 = arith.andi %54, %58 : vector<1x256xi1>
    %cst_18 = arith.constant 0.000000e+00 : f32
    %60 = vector.shape_cast %59 : vector<1x256xi1> to vector<1x256xi1>
    %61 = vector.broadcast %60 : vector<1x256xi1> to vector<8x256xi1>
    %62 = vector.broadcast %cst_18 : f32 to vector<8x256xf32>
    %63 = arith.select %61, %50, %62 : vector<8x256xi1>, vector<8x256xf32>
    %64 = vector.extract_strided_slice %21 {offsets = [0, 3], sizes = [8, 256], strides = [1, 1]} : vector<8x264xf32> to vector<8x256xf32>
    %c-1_i32 = arith.constant -1 : i32
    %65 = vector.broadcast %c-1_i32 : i32 to vector<1x256xi32>
    %66 = arith.addi %18, %65 : vector<1x256xi32>
    %c0_i32_19 = arith.constant 0 : i32
    %67 = vector.broadcast %c0_i32_19 : i32 to vector<1x256xi32>
    %68 = arith.cmpi sge, %66, %67 : vector<1x256xi32>
    %c-1_i32_20 = arith.constant -1 : i32
    %69 = vector.broadcast %c-1_i32_20 : i32 to vector<1x256xi32>
    %70 = arith.addi %18, %69 : vector<1x256xi32>
    %c16_i32_21 = arith.constant 16 : i32
    %71 = vector.broadcast %c16_i32_21 : i32 to vector<1x256xi32>
    %72 = arith.cmpi slt, %70, %71 : vector<1x256xi32>
    %73 = arith.andi %68, %72 : vector<1x256xi1>
    %cst_22 = arith.constant 0.000000e+00 : f32
    %74 = vector.shape_cast %73 : vector<1x256xi1> to vector<1x256xi1>
    %75 = vector.broadcast %74 : vector<1x256xi1> to vector<8x256xi1>
    %76 = vector.broadcast %cst_22 : f32 to vector<8x256xf32>
    %77 = arith.select %75, %64, %76 : vector<8x256xi1>, vector<8x256xf32>
    %78 = vector.extract_strided_slice %21 {offsets = [0, 4], sizes = [8, 256], strides = [1, 1]} : vector<8x264xf32> to vector<8x256xf32>
    %79 = vector.extract_strided_slice %21 {offsets = [0, 5], sizes = [8, 256], strides = [1, 1]} : vector<8x264xf32> to vector<8x256xf32>
    %c1_i32_23 = arith.constant 1 : i32
    %80 = vector.broadcast %c1_i32_23 : i32 to vector<1x256xi32>
    %81 = arith.addi %18, %80 : vector<1x256xi32>
    %c0_i32_24 = arith.constant 0 : i32
    %82 = vector.broadcast %c0_i32_24 : i32 to vector<1x256xi32>
    %83 = arith.cmpi sge, %81, %82 : vector<1x256xi32>
    %c1_i32_25 = arith.constant 1 : i32
    %84 = vector.broadcast %c1_i32_25 : i32 to vector<1x256xi32>
    %85 = arith.addi %18, %84 : vector<1x256xi32>
    %c16_i32_26 = arith.constant 16 : i32
    %86 = vector.broadcast %c16_i32_26 : i32 to vector<1x256xi32>
    %87 = arith.cmpi slt, %85, %86 : vector<1x256xi32>
    %88 = arith.andi %83, %87 : vector<1x256xi1>
    %cst_27 = arith.constant 0.000000e+00 : f32
    %89 = vector.shape_cast %88 : vector<1x256xi1> to vector<1x256xi1>
    %90 = vector.broadcast %89 : vector<1x256xi1> to vector<8x256xi1>
    %91 = vector.broadcast %cst_27 : f32 to vector<8x256xf32>
    %92 = arith.select %90, %79, %91 : vector<8x256xi1>, vector<8x256xf32>
    %93 = vector.extract_strided_slice %21 {offsets = [0, 6], sizes = [8, 256], strides = [1, 1]} : vector<8x264xf32> to vector<8x256xf32>
    %c2_i32 = arith.constant 2 : i32
    %94 = vector.broadcast %c2_i32 : i32 to vector<1x256xi32>
    %95 = arith.addi %18, %94 : vector<1x256xi32>
    %c0_i32_28 = arith.constant 0 : i32
    %96 = vector.broadcast %c0_i32_28 : i32 to vector<1x256xi32>
    %97 = arith.cmpi sge, %95, %96 : vector<1x256xi32>
    %c2_i32_29 = arith.constant 2 : i32
    %98 = vector.broadcast %c2_i32_29 : i32 to vector<1x256xi32>
    %99 = arith.addi %18, %98 : vector<1x256xi32>
    %c16_i32_30 = arith.constant 16 : i32
    %100 = vector.broadcast %c16_i32_30 : i32 to vector<1x256xi32>
    %101 = arith.cmpi slt, %99, %100 : vector<1x256xi32>
    %102 = arith.andi %97, %101 : vector<1x256xi1>
    %cst_31 = arith.constant 0.000000e+00 : f32
    %103 = vector.shape_cast %102 : vector<1x256xi1> to vector<1x256xi1>
    %104 = vector.broadcast %103 : vector<1x256xi1> to vector<8x256xi1>
    %105 = vector.broadcast %cst_31 : f32 to vector<8x256xf32>
    %106 = arith.select %104, %93, %105 : vector<8x256xi1>, vector<8x256xf32>
    %107 = vector.extract_strided_slice %21 {offsets = [0, 7], sizes = [8, 256], strides = [1, 1]} : vector<8x264xf32> to vector<8x256xf32>
    %c3_i32 = arith.constant 3 : i32
    %108 = vector.broadcast %c3_i32 : i32 to vector<1x256xi32>
    %109 = arith.addi %18, %108 : vector<1x256xi32>
    %c0_i32_32 = arith.constant 0 : i32
    %110 = vector.broadcast %c0_i32_32 : i32 to vector<1x256xi32>
    %111 = arith.cmpi sge, %109, %110 : vector<1x256xi32>
    %c3_i32_33 = arith.constant 3 : i32
    %112 = vector.broadcast %c3_i32_33 : i32 to vector<1x256xi32>
    %113 = arith.addi %18, %112 : vector<1x256xi32>
    %c16_i32_34 = arith.constant 16 : i32
    %114 = vector.broadcast %c16_i32_34 : i32 to vector<1x256xi32>
    %115 = arith.cmpi slt, %113, %114 : vector<1x256xi32>
    %116 = arith.andi %111, %115 : vector<1x256xi1>
    %cst_35 = arith.constant 0.000000e+00 : f32
    %117 = vector.shape_cast %116 : vector<1x256xi1> to vector<1x256xi1>
    %118 = vector.broadcast %117 : vector<1x256xi1> to vector<8x256xi1>
    %119 = vector.broadcast %cst_35 : f32 to vector<8x256xf32>
    %120 = arith.select %118, %107, %119 : vector<8x256xi1>, vector<8x256xf32>
    %121 = vector.extract_strided_slice %21 {offsets = [0, 8], sizes = [8, 256], strides = [1, 1]} : vector<8x264xf32> to vector<8x256xf32>
    %c4_i32 = arith.constant 4 : i32
    %122 = vector.broadcast %c4_i32 : i32 to vector<1x256xi32>
    %123 = arith.addi %18, %122 : vector<1x256xi32>
    %c0_i32_36 = arith.constant 0 : i32
    %124 = vector.broadcast %c0_i32_36 : i32 to vector<1x256xi32>
    %125 = arith.cmpi sge, %123, %124 : vector<1x256xi32>
    %c4_i32_37 = arith.constant 4 : i32
    %126 = vector.broadcast %c4_i32_37 : i32 to vector<1x256xi32>
    %127 = arith.addi %18, %126 : vector<1x256xi32>
    %c16_i32_38 = arith.constant 16 : i32
    %128 = vector.broadcast %c16_i32_38 : i32 to vector<1x256xi32>
    %129 = arith.cmpi slt, %127, %128 : vector<1x256xi32>
    %130 = arith.andi %125, %129 : vector<1x256xi1>
    %cst_39 = arith.constant 0.000000e+00 : f32
    %131 = vector.shape_cast %130 : vector<1x256xi1> to vector<1x256xi1>
    %132 = vector.broadcast %131 : vector<1x256xi1> to vector<8x256xi1>
    %133 = vector.broadcast %cst_39 : f32 to vector<8x256xf32>
    %134 = arith.select %132, %121, %133 : vector<8x256xi1>, vector<8x256xf32>
    %135 = tpu.concatenate %35, %49, %63, %77, %78, %92, %106, %120, %134 in 0 : vector<8x256xf32>, vector<8x256xf32>, vector<8x256xf32>, vector<8x256xf32>, vector<8x256xf32>, vector<8x256xf32>, vector<8x256xf32>, vector<8x256xf32>, vector<8x256xf32> -> vector<72x256xf32>
    %cst_40 = arith.constant dense<0.000000e+00> : vector<8x256xf32>
    %136 = tpu.matmul %19, %135, %cst_40 {dimension_numbers = #tpu.dot_dimension_numbers<[1], [0], [0], [1], [0, 0, 1, 1], [], []>} : vector<8x72xf32>, vector<72x256xf32>, vector<8x256xf32> -> vector<8x256xf32>
    %c0_41 = arith.constant 0 : index
    %c0_42 = arith.constant 0 : index
    %137 = vector.load %arg3[%c0_41, %c0_42] : memref<8x1xf32, #tpu.memory_space<vmem>>, vector<8x1xf32>
    %138 = vector.broadcast %137 : vector<8x1xf32> to vector<8x256xf32>
    %139 = arith.addf %136, %138 : vector<8x256xf32>
    %cst_43 = arith.constant 0.000000e+00 : f32
    %140 = vector.broadcast %cst_43 : f32 to vector<8x256xf32>
    %141 = arith.subf %140, %139 : vector<8x256xf32>
    %cst_44 = arith.constant 8.000000e+01 : f32
    %142 = vector.broadcast %cst_44 : f32 to vector<8x256xf32>
    %143 = arith.minimumf %141, %142 : vector<8x256xf32>
    %144 = math.exp %143 : vector<8x256xf32>
    %cst_45 = arith.constant 1.000000e+00 : f32
    %145 = vector.broadcast %cst_45 : f32 to vector<8x256xf32>
    %146 = arith.addf %145, %144 : vector<8x256xf32>
    %147 = tpu.reciprocal %146 {approx = true} : vector<8x256xf32> -> vector<8x256xf32>
    %148 = arith.mulf %146, %147 : vector<8x256xf32>
    %cst_46 = arith.constant 2.000000e+00 : f32
    %149 = vector.broadcast %cst_46 : f32 to vector<8x256xf32>
    %150 = arith.subf %149, %148 : vector<8x256xf32>
    %151 = arith.mulf %147, %150 : vector<8x256xf32>
    %152 = arith.mulf %139, %151 : vector<8x256xf32>
    %c0_47 = arith.constant 0 : index
    %c0_48 = arith.constant 0 : index
    %153 = vector.load %arg4[%c0_47, %c0_48] : memref<8x72xf32, #tpu.memory_space<vmem>>, vector<8x72xf32>
    %cst_49 = arith.constant 0.000000e+00 : f32
    %154 = vector.broadcast %cst_49 : f32 to vector<8x64xf32>
    %155 = tpu.concatenate %154, %152, %154 in 1 : vector<8x64xf32>, vector<8x256xf32>, vector<8x64xf32> -> vector<8x384xf32>
    %156 = vector.extract_strided_slice %155 {offsets = [0, 0], sizes = [8, 256], strides = [1, 1]} : vector<8x384xf32> to vector<8x256xf32>
    %157 = vector.extract_strided_slice %155 {offsets = [0, 16], sizes = [8, 256], strides = [1, 1]} : vector<8x384xf32> to vector<8x256xf32>
    %158 = vector.extract_strided_slice %155 {offsets = [0, 32], sizes = [8, 256], strides = [1, 1]} : vector<8x384xf32> to vector<8x256xf32>
    %159 = vector.extract_strided_slice %155 {offsets = [0, 48], sizes = [8, 256], strides = [1, 1]} : vector<8x384xf32> to vector<8x256xf32>
    %160 = vector.extract_strided_slice %155 {offsets = [0, 64], sizes = [8, 256], strides = [1, 1]} : vector<8x384xf32> to vector<8x256xf32>
    %161 = vector.extract_strided_slice %155 {offsets = [0, 80], sizes = [8, 256], strides = [1, 1]} : vector<8x384xf32> to vector<8x256xf32>
    %162 = vector.extract_strided_slice %155 {offsets = [0, 96], sizes = [8, 256], strides = [1, 1]} : vector<8x384xf32> to vector<8x256xf32>
    %163 = vector.extract_strided_slice %155 {offsets = [0, 112], sizes = [8, 256], strides = [1, 1]} : vector<8x384xf32> to vector<8x256xf32>
    %164 = vector.extract_strided_slice %155 {offsets = [0, 128], sizes = [8, 256], strides = [1, 1]} : vector<8x384xf32> to vector<8x256xf32>
    %165 = tpu.concatenate %156, %157, %158, %159, %160, %161, %162, %163, %164 in 0 : vector<8x256xf32>, vector<8x256xf32>, vector<8x256xf32>, vector<8x256xf32>, vector<8x256xf32>, vector<8x256xf32>, vector<8x256xf32>, vector<8x256xf32>, vector<8x256xf32> -> vector<72x256xf32>
    %cst_50 = arith.constant dense<0.000000e+00> : vector<8x256xf32>
    %166 = tpu.matmul %153, %165, %cst_50 {dimension_numbers = #tpu.dot_dimension_numbers<[1], [0], [0], [1], [0, 0, 1, 1], [], []>} : vector<8x72xf32>, vector<72x256xf32>, vector<8x256xf32> -> vector<8x256xf32>
    %c0_51 = arith.constant 0 : index
    %c0_52 = arith.constant 0 : index
    %167 = vector.load %arg5[%c0_51, %c0_52] : memref<8x1xf32, #tpu.memory_space<vmem>>, vector<8x1xf32>
    %168 = vector.broadcast %167 : vector<8x1xf32> to vector<8x256xf32>
    %169 = arith.addf %166, %168 : vector<8x256xf32>
    %cst_53 = arith.constant 0.000000e+00 : f32
    %170 = vector.broadcast %cst_53 : f32 to vector<8x256xf32>
    %171 = arith.subf %170, %169 : vector<8x256xf32>
    %cst_54 = arith.constant 8.000000e+01 : f32
    %172 = vector.broadcast %cst_54 : f32 to vector<8x256xf32>
    %173 = arith.minimumf %171, %172 : vector<8x256xf32>
    %174 = math.exp %173 : vector<8x256xf32>
    %cst_55 = arith.constant 1.000000e+00 : f32
    %175 = vector.broadcast %cst_55 : f32 to vector<8x256xf32>
    %176 = arith.addf %175, %174 : vector<8x256xf32>
    %177 = tpu.reciprocal %176 {approx = true} : vector<8x256xf32> -> vector<8x256xf32>
    %178 = arith.mulf %176, %177 : vector<8x256xf32>
    %cst_56 = arith.constant 2.000000e+00 : f32
    %179 = vector.broadcast %cst_56 : f32 to vector<8x256xf32>
    %180 = arith.subf %179, %178 : vector<8x256xf32>
    %181 = arith.mulf %177, %180 : vector<8x256xf32>
    %182 = arith.mulf %169, %181 : vector<8x256xf32>
    %c0_57 = arith.constant 0 : index
    %c0_58 = arith.constant 0 : index
    %183 = vector.load %arg6[%c0_57, %c0_58] : memref<16x16xf32, #tpu.memory_space<vmem>>, vector<16x16xf32>
    %184 = tpu.concatenate %1, %182 in 0 : vector<8x256xf32>, vector<8x256xf32> -> vector<16x256xf32>
    %cst_59 = arith.constant dense<0.000000e+00> : vector<16x256xf32>
    %185 = tpu.matmul %183, %184, %cst_59 {dimension_numbers = #tpu.dot_dimension_numbers<[1], [0], [0], [1], [0, 0, 1, 1], [], []>} : vector<16x16xf32>, vector<16x256xf32>, vector<16x256xf32> -> vector<16x256xf32>
    %c0_60 = arith.constant 0 : index
    %c0_61 = arith.constant 0 : index
    %186 = vector.load %arg7[%c0_60, %c0_61] : memref<16x1xf32, #tpu.memory_space<vmem>>, vector<16x1xf32>
    %187 = vector.broadcast %186 : vector<16x1xf32> to vector<16x256xf32>
    %188 = arith.addf %185, %187 : vector<16x256xf32>
    %cst_62 = arith.constant 0.000000e+00 : f32
    %189 = vector.broadcast %cst_62 : f32 to vector<16x256xf32>
    %190 = arith.subf %189, %188 : vector<16x256xf32>
    %cst_63 = arith.constant 8.000000e+01 : f32
    %191 = vector.broadcast %cst_63 : f32 to vector<16x256xf32>
    %192 = arith.minimumf %190, %191 : vector<16x256xf32>
    %193 = math.exp %192 : vector<16x256xf32>
    %cst_64 = arith.constant 1.000000e+00 : f32
    %194 = vector.broadcast %cst_64 : f32 to vector<16x256xf32>
    %195 = arith.addf %194, %193 : vector<16x256xf32>
    %196 = tpu.reciprocal %195 {approx = true} : vector<16x256xf32> -> vector<16x256xf32>
    %197 = arith.mulf %195, %196 : vector<16x256xf32>
    %cst_65 = arith.constant 2.000000e+00 : f32
    %198 = vector.broadcast %cst_65 : f32 to vector<16x256xf32>
    %199 = arith.subf %198, %197 : vector<16x256xf32>
    %200 = arith.mulf %196, %199 : vector<16x256xf32>
    %201 = arith.mulf %188, %200 : vector<16x256xf32>
    %c0_66 = arith.constant 0 : index
    %c0_67 = arith.constant 0 : index
    %c0_68 = arith.constant 0 : index
    %202 = vector.load %arg8[%c0_66, %c0_67, %c0_68] : memref<1x16x256xf32, #tpu.memory_space<vmem>>, vector<1x16x256xf32>
    %203 = vector.shape_cast %202 : vector<1x16x256xf32> to vector<16x256xf32>
    %204 = vector.shape_cast %201 : vector<16x256xf32> to vector<1x16x256xf32>
    tpu.vector_store %arg8[%c0_66, %c0_67, %c0_68], %204 {strides = array<i32>} : memref<1x16x256xf32, #tpu.memory_space<vmem>>, vector<1x16x256xf32>,
    return
  }
  func.func @transform_0(%arg0: i32) -> (i32, i32, i32) {
    %c0_i32 = arith.constant 0 : i32
    %c0_i32_0 = arith.constant 0 : i32
    %c0_i32_1 = arith.constant 0 : i32
    return %arg0, %c0_i32, %c0_i32_0 : i32, i32, i32
  }
  func.func @transform_1(%arg0: i32) -> (i32, i32) {
    %c0_i32 = arith.constant 0 : i32
    %c0_i32_0 = arith.constant 0 : i32
    %c0_i32_1 = arith.constant 0 : i32
    return %c0_i32, %c0_i32_0 : i32, i32
  }
  func.func @transform_2(%arg0: i32) -> (i32, i32) {
    %c0_i32 = arith.constant 0 : i32
    %c0_i32_0 = arith.constant 0 : i32
    %c0_i32_1 = arith.constant 0 : i32
    return %c0_i32, %c0_i32_0 : i32, i32
  }
  func.func @transform_3(%arg0: i32) -> (i32, i32) {
    %c0_i32 = arith.constant 0 : i32
    %c0_i32_0 = arith.constant 0 : i32
    %c0_i32_1 = arith.constant 0 : i32
    return %c0_i32, %c0_i32_0 : i32, i32
  }
  func.func @transform_4(%arg0: i32) -> (i32, i32) {
    %c0_i32 = arith.constant 0 : i32
    %c0_i32_0 = arith.constant 0 : i32
    %c0_i32_1 = arith.constant 0 : i32
    return %c0_i32, %c0_i32_0 : i32, i32
  }
  func.func @transform_5(%arg0: i32) -> (i32, i32) {
    %c0_i32 = arith.constant 0 : i32
    %c0_i32_0 = arith.constant 0 : i32
    %c0_i32_1 = arith.constant 0 : i32
    return %c0_i32, %c0_i32_0 : i32, i32
  }
  func.func @transform_6(%arg0: i32) -> (i32, i32) {
    %c0_i32 = arith.constant 0 : i32
    %c0_i32_0 = arith.constant 0 : i32
    %c0_i32_1 = arith.constant 0 : i32
    return %c0_i32, %c0_i32_0 : i32, i32
  }
  func.func @transform_7(%arg0: i32) -> (i32, i32, i32) {
    %c0_i32 = arith.constant 0 : i32
    %c0_i32_0 = arith.constant 0 : i32
    %c0_i32_1 = arith.constant 0 : i32
    return %arg0, %c0_i32, %c0_i32_0 : i32, i32, i32
  }
}

</mosaic_0001>

<llo_original>
// kernel: spc_forward.1
$region0: #{spc_forward.1}
  #allocation0 [shape = 'u32[]', space=smem, size = 0x4, offset = 0x4, fixed_abs, tag = 'smem constant byte address 0x4 - core index']
  #allocation1 [shape = 'u32[72,128]{1,0:T(1,128)}', space=vmem, size = 0x9000, scoped, tag = 'internal scratch']
  %s0 = inlined_call_operand.vmem [shape: f32[2,8,256], index: 0, kind: input, shape index: {}]
  %s1 = inlined_call_operand.vmem [shape: f32[8,72], index: 1, kind: input, shape index: {}]
  %s2 = inlined_call_operand.vmem [shape: f32[8,1], index: 2, kind: input, shape index: {}]
  %s3 = inlined_call_operand.vmem [shape: f32[8,72], index: 3, kind: input, shape index: {}]
  %s4 = inlined_call_operand.vmem [shape: f32[8,1], index: 4, kind: input, shape index: {}]
  %s5 = inlined_call_operand.vmem [shape: f32[16,16], index: 5, kind: input, shape index: {}]
  %s6 = inlined_call_operand.vmem [shape: f32[16,1], index: 6, kind: input, shape index: {}]
  %s7 = inlined_call_operand.vmem [shape: f32[2,16,256], index: 7, kind: output, shape index: {}]
  %s8 = sld [smem:[#allocation0]]
  $region61: #{spc_forward.1} parent=0
    _
  %s10 = ssub.s32 1, %s8
  %s11 = scalar_select 0, %s10, %s8
  loop: start=0, step=1, limit=4
  $region2: #{spc_forward.1} parent=0 // loop_pre_header
    _
  $region3: #{spc_forward.1} parent=0 // loop_header
    %s13 = sphi 0, %s17
    %p14 = scmp.ge.s32.totalorder %s13, 4
    %s23 = sphi 0, %s25
    %s26 = sphi 0, %s23
    %s27 = sphi 0, %s26
    %s43 = sphi 0, %s27
    %s47 = sphi 0, %s47
    %s49 = sphi 0, %s47
    %s50 = sphi 0, %s49
    %s64 = sphi 0, %s50
    %s68 = sphi 0, %s68
    %s70 = sphi 0, %s68
    %s71 = sphi 0, %s70
    %s85 = sphi 0, %s71
    %s89 = sphi 0, %s89
    %s91 = sphi 0, %s89
    %s92 = sphi 0, %s91
    %s106 = sphi 0, %s92
    %s110 = sphi 0, %s110
    %s112 = sphi 0, %s110
    %s113 = sphi 0, %s112
    %s127 = sphi 0, %s113
    %s131 = sphi 0, %s131
    %s133 = sphi 0, %s131
    %s134 = sphi 0, %s133
    %s148 = sphi 0, %s134
    %s152 = sphi 0, %s152
    %s154 = sphi 0, %s152
    %s155 = sphi 0, %s154
    %s169 = sphi 0, %s155
    %s175 = sphi 0, %s177
    %s178 = sphi 0, %s175
    %s179 = sphi 0, %s178
    %s195 = sphi 0, %s179
  $region4: #{spc_forward.1} parent=0 // loop_header_branch
    %16 = sbr.rel (%p14) target = $region8
  $region5: #{spc_forward.1} parent=0 // loop_body
    %s18 = ssub.s32 %s13, 1
    %s19 = ssub.s32 %s13, 2
    %s20 = sadd.s32 %s13, 1
    %s21 = ssub.s32 %s13, %s20
    %p22 = scmp.eq.s32.totalorder %s21, 0
    %s24 = sadd.s32 %s23, 1
    %s25 = scalar_select %p22, %s23, %s24
    %p28 = pneg %p22
    %p29 = scmp.eq.s32.totalorder %s13, 1
    %p30 = por %p28, %p29
    %p31 = scmp.ne.s32.totalorder %s23, %s26
    %p32 = scmp.eq.s32.totalorder %s13, 0
    %p33 = por %p31, %p32
    %p34 = scmp.ne.s32.totalorder %s23, %s26
    %p35 = scmp.eq.s32.totalorder %s18, 1
    %p36 = por %p34, %p35
    %p37 = scmp.ne.s32.totalorder %s26, %s27
    %p38 = scmp.eq.s32.totalorder %s18, 0
    %p39 = por %p37, %p38
    %p40 = scmp.ne.s32.totalorder %s26, %s27
    %p41 = scmp.eq.s32.totalorder %s19, 1
    %p42 = por %p40, %p41
    %p44 = scmp.ne.s32.totalorder %s27, %s43
    %p45 = scmp.eq.s32.totalorder %s19, 0
    %p46 = por %p44, %p45
    %s48 = sadd.s32 %s47, 1
    %p51 = scmp.eq.s32.totalorder %s13, 1
    %p52 = scmp.ne.s32.totalorder %s47, %s49
    %p53 = scmp.eq.s32.totalorder %s13, 0
    %p54 = por %p52, %p53
    %p55 = scmp.ne.s32.totalorder %s47, %s49
    %p56 = scmp.eq.s32.totalorder %s18, 1
    %p57 = por %p55, %p56
    %p58 = scmp.ne.s32.totalorder %s49, %s50
    %p59 = scmp.eq.s32.totalorder %s18, 0
    %p60 = por %p58, %p59
    %p61 = scmp.ne.s32.totalorder %s49, %s50
    %p62 = scmp.eq.s32.totalorder %s19, 1
    %p63 = por %p61, %p62
    %p65 = scmp.ne.s32.totalorder %s50, %s64
    %p66 = scmp.eq.s32.totalorder %s19, 0
    %p67 = por %p65, %p66
    %s69 = sadd.s32 %s68, 1
    %p72 = scmp.eq.s32.totalorder %s13, 1
    %p73 = scmp.ne.s32.totalorder %s68, %s70
    %p74 = scmp.eq.s32.totalorder %s13, 0
    %p75 = por %p73, %p74
    %p76 = scmp.ne.s32.totalorder %s68, %s70
    %p77 = scmp.eq.s32.totalorder %s18, 1
    %p78 = por %p76, %p77
    %p79 = scmp.ne.s32.totalorder %s70, %s71
    %p80 = scmp.eq.s32.totalorder %s18, 0
    %p81 = por %p79, %p80
    %p82 = scmp.ne.s32.totalorder %s70, %s71
    %p83 = scmp.eq.s32.totalorder %s19, 1
    %p84 = por %p82, %p83
    %p86 = scmp.ne.s32.totalorder %s71, %s85
    %p87 = scmp.eq.s32.totalorder %s19, 0
    %p88 = por %p86, %p87
    %s90 = sadd.s32 %s89, 1
    %p93 = scmp.eq.s32.totalorder %s13, 1
    %p94 = scmp.ne.s32.totalorder %s89, %s91
    %p95 = scmp.eq.s32.totalorder %s13, 0
    %p96 = por %p94, %p95
    %p97 = scmp.ne.s32.totalorder %s89, %s91
    %p98 = scmp.eq.s32.totalorder %s18, 1
    %p99 = por %p97, %p98
    %p100 = scmp.ne.s32.totalorder %s91, %s92
    %p101 = scmp.eq.s32.totalorder %s18, 0
    %p102 = por %p100, %p101
    %p103 = scmp.ne.s32.totalorder %s91, %s92
    %p104 = scmp.eq.s32.totalorder %s19, 1
    %p105 = por %p103, %p104
    %p107 = scmp.ne.s32.totalorder %s92, %s106
    %p108 = scmp.eq.s32.totalorder %s19, 0
    %p109 = por %p107, %p108
    %s111 = sadd.s32 %s110, 1
    %p114 = scmp.eq.s32.totalorder %s13, 1
    %p115 = scmp.ne.s32.totalorder %s110, %s112
    %p116 = scmp.eq.s32.totalorder %s13, 0
    %p117 = por %p115, %p116
    %p118 = scmp.ne.s32.totalorder %s110, %s112
    %p119 = scmp.eq.s32.totalorder %s18, 1
    %p120 = por %p118, %p119
    %p121 = scmp.ne.s32.totalorder %s112, %s113
    %p122 = scmp.eq.s32.totalorder %s18, 0
    %p123 = por %p121, %p122
    %p124 = scmp.ne.s32.totalorder %s112, %s113
    %p125 = scmp.eq.s32.totalorder %s19, 1
    %p126 = por %p124, %p125
    %p128 = scmp.ne.s32.totalorder %s113, %s127
    %p129 = scmp.eq.s32.totalorder %s19, 0
    %p130 = por %p128, %p129
    %s132 = sadd.s32 %s131, 1
    %p135 = scmp.eq.s32.totalorder %s13, 1
    %p136 = scmp.ne.s32.totalorder %s131, %s133
    %p137 = scmp.eq.s32.totalorder %s13, 0
    %p138 = por %p136, %p137
    %p139 = scmp.ne.s32.totalorder %s131, %s133
    %p140 = scmp.eq.s32.totalorder %s18, 1
    %p141 = por %p139, %p140
    %p142 = scmp.ne.s32.totalorder %s133, %s134
    %p143 = scmp.eq.s32.totalorder %s18, 0
    %p144 = por %p142, %p143
    %p145 = scmp.ne.s32.totalorder %s133, %s134
    %p146 = scmp.eq.s32.totalorder %s19, 1
    %p147 = por %p145, %p146
    %p149 = scmp.ne.s32.totalorder %s134, %s148
    %p150 = scmp.eq.s32.totalorder %s19, 0
    %p151 = por %p149, %p150
    %s153 = sadd.s32 %s152, 1
    %p156 = scmp.eq.s32.totalorder %s13, 1
    %p157 = scmp.ne.s32.totalorder %s152, %s154
    %p158 = scmp.eq.s32.totalorder %s13, 0
    %p159 = por %p157, %p158
    %p160 = scmp.ne.s32.totalorder %s152, %s154
    %p161 = scmp.eq.s32.totalorder %s18, 1
    %p162 = por %p160, %p161
    %p163 = scmp.ne.s32.totalorder %s154, %s155
    %p164 = scmp.eq.s32.totalorder %s18, 0
    %p165 = por %p163, %p164
    %p166 = scmp.ne.s32.totalorder %s154, %s155
    %p167 = scmp.eq.s32.totalorder %s19, 1
    %p168 = por %p166, %p167
    %p170 = scmp.ne.s32.totalorder %s155, %s169
    %p171 = scmp.eq.s32.totalorder %s19, 0
    %p172 = por %p170, %p171
    %s173 = ssub.s32 %s13, %s20
    %p174 = scmp.eq.s32.totalorder %s173, 0
    %s176 = sadd.s32 %s175, 1
    %s177 = scalar_select %p174, %s175, %s176
    %p180 = pneg %p174
    %p181 = scmp.eq.s32.totalorder %s13, 1
    %p182 = por %p180, %p181
    %p183 = scmp.ne.s32.totalorder %s175, %s178
    %p184 = scmp.eq.s32.totalorder %s13, 0
    %p185 = por %p183, %p184
    %p186 = scmp.ne.s32.totalorder %s175, %s178
    %p187 = scmp.eq.s32.totalorder %s18, 1
    %p188 = por %p186, %p187
    %p189 = scmp.ne.s32.totalorder %s178, %s179
    %p190 = scmp.eq.s32.totalorder %s18, 0
    %p191 = por %p189, %p190
    %p192 = scmp.ne.s32.totalorder %s178, %s179
    %p193 = scmp.eq.s32.totalorder %s19, 1
    %p194 = por %p192, %p193
    %p196 = scmp.ne.s32.totalorder %s179, %s195
    %p197 = scmp.eq.s32.totalorder %s19, 0
    %p198 = por %p196, %p197
    %p199 = scmp.le.s32.totalorder 1, %s13
    %p200 = scmp.lt.s32.totalorder %s13, 3
    %p201 = pnand %p199, %p200
    %p202 = pneg %p201
    // Predicated region
    $region9: #{spc_forward.1} parent=5 // pred_check
      _
    $region10: #{spc_forward.1} parent=5 // pred_check_branch
      %204 = sbr.rel (%p201) target = $region12
    $region11: #{spc_forward.1} parent=5 // pred_region
      %s205 = ssub.s32 %s13, 1
      // Predicated region
      $region13: #{spc_forward.1} parent=11 // pred_check
        %p206 = pneg %p60
      $region14: #{spc_forward.1} parent=11 // pred_check_branch
        %208 = sbr.rel (%p206) target = $region16
      $region15: #{spc_forward.1} parent=11 // pred_region
        _
      $region16: #{spc_forward.1} parent=11 // pred_fallthru
        _
      // Predicated region
      $region17: #{spc_forward.1} parent=11 // pred_check
        %p209 = pneg %p81
      $region18: #{spc_forward.1} parent=11 // pred_check_branch
        %211 = sbr.rel (%p209) target = $region20
      $region19: #{spc_forward.1} parent=11 // pred_region
        _
      $region20: #{spc_forward.1} parent=11 // pred_fallthru
        _
      // Predicated region
      $region21: #{spc_forward.1} parent=11 // pred_check
        %p212 = pneg %p102
      $region22: #{spc_forward.1} parent=11 // pred_check_branch
        %214 = sbr.rel (%p212) target = $region24
      $region23: #{spc_forward.1} parent=11 // pred_region
        _
      $region24: #{spc_forward.1} parent=11 // pred_fallthru
        _
      // Predicated region
      $region25: #{spc_forward.1} parent=11 // pred_check
        %p215 = pneg %p123
      $region26: #{spc_forward.1} parent=11 // pred_check_branch
        %217 = sbr.rel (%p215) target = $region28
      $region27: #{spc_forward.1} parent=11 // pred_region
        _
      $region28: #{spc_forward.1} parent=11 // pred_fallthru
        _
      // Predicated region
      $region29: #{spc_forward.1} parent=11 // pred_check
        %p218 = pneg %p144
      $region30: #{spc_forward.1} parent=11 // pred_check_branch
        %220 = sbr.rel (%p218) target = $region32
      $region31: #{spc_forward.1} parent=11 // pred_region
        _
      $region32: #{spc_forward.1} parent=11 // pred_fallthru
        _
      // Predicated region
      $region33: #{spc_forward.1} parent=11 // pred_check
        %p221 = pneg %p165
      $region34: #{spc_forward.1} parent=11 // pred_check_branch
        %223 = sbr.rel (%p221) target = $region36
      $region35: #{spc_forward.1} parent=11 // pred_region
        _
      $region36: #{spc_forward.1} parent=11 // pred_fallthru
        _
    $region12: #{spc_forward.1} parent=5 // pred_fallthru
      _
    %p224 = scmp.lt.s32.totalorder %s13, 2
    // Predicated region
    $region37: #{spc_forward.1} parent=5 // pred_check
      %p225 = pneg %p224
    $region38: #{spc_forward.1} parent=5 // pred_check_branch
      %227 = sbr.rel (%p225) target = $region40
    $region39: #{spc_forward.1} parent=5 // pred_region
      // Predicated region
      $region41: #{spc_forward.1} parent=39 // pred_check
        %p228 = pneg %p33
      $region42: #{spc_forward.1} parent=39 // pred_check_branch
        %230 = sbr.rel (%p228) target = $region44
      $region43: #{spc_forward.1} parent=39 // pred_region
        %p231 = scmp.lt.s32.totalorder %s13, 1
        %s232 = scalar_select %p231, %s13, 1
        %s233 = smul.addr %s232, 2
        %s234 = smul.addr %s233, 8
        %s235 = scalar_lea.vmem %s0, %s234
      $region44: #{spc_forward.1} parent=39 // pred_fallthru
        _
    $region40: #{spc_forward.1} parent=5 // pred_fallthru
      _
    %p236 = scmp.le.s32.totalorder 1, %s13
    %p237 = scmp.lt.s32.totalorder %s13, 3
    %p238 = pnand %p236, %p237
    %p239 = pneg %p238
    // Predicated region
    $region45: #{spc_forward.1} parent=5 // pred_check
      _
    $region46: #{spc_forward.1} parent=5 // pred_check_branch
      %241 = sbr.rel (%p238) target = $region48
    $region47: #{spc_forward.1} parent=5 // pred_region
      %s242 = ssub.s32 %s13, 1
      %p243 = scmp.lt.s32.totalorder %s18, 1
      %s244 = scalar_select %p243, %s18, 1
      %s245 = smul.addr %s244, 2
      %s246 = smul.addr %s245, 8
      %s247 = scalar_lea.vmem %s0, %s246
      %p248 = pneg %p39
      %p249 = pneg %p36
      %p250 = pneg %p60
      %p251 = pneg %p57
      %p252 = pneg %p81
      %p253 = pneg %p78
      %p254 = pneg %p102
      %p255 = pneg %p99
      %p256 = pneg %p123
      %p257 = pneg %p120
      %p258 = pneg %p144
      %p259 = pneg %p141
      %p260 = pneg %p165
      %p261 = pneg %p162
      %p262 = pneg %p191
      %p263 = pneg %p188
      %p264 = scmp.lt.s32.totalorder %s18, 1
      %s265 = scalar_select %p264, %s18, 1
      %s266 = smul.addr %s265, 4
      %s267 = smul.addr %s266, 8
      %s268 = scalar_lea.vmem %s7, %s267
      %p269 = scmp.lt.s32.totalorder %s18, 1
      %s270 = scalar_select %p269, %s18, 1
      %s271 = smul.addr %s270, 2
      %s272 = smul.addr %s271, 8
      %s273 = scalar_lea.vmem %s0, %s272
      %p274 = scmp.lt.s32.totalorder %s18, 1
      %s275 = scalar_select %p274, %s18, 1
      %s276 = smul.addr %s275, 4
      %s277 = smul.addr %s276, 8
      %s278 = scalar_lea.vmem %s7, %s277
      %v279 = vld [vmem:[%s273] sm:$0xff]
      %v280 = vld [vmem:[%s273 + $0x8] sm:$0xff]
      %v281 = vlaneseq
      %v282 = vand.u32 %v281, 127
      %v283 = vadd.s32 %v282, 128
      %vm284 = vcmp.lt.s32.totalorder %v282, 0
      %v285 = vsub.s32 0, %v282
      %v286 = vsel %vm284, %v285, %v282
      %v287 = vshrl.u32 %v286, 4
      %v288 = vand.u32 %v286, 15
      %v289 = vsub.s32 0, %v288
      %v290 = vsel %vm284, %v289, %v288
      %vm291 = vcmp.lt.s32.totalorder %v283, 0
      %v292 = vsub.s32 0, %v283
      %v293 = vsel %vm291, %v292, %v283
      %v294 = vshrl.u32 %v293, 4
      %v295 = vand.u32 %v293, 15
      %v296 = vsub.s32 0, %v295
      %v297 = vsel %vm291, %v296, %v295
      %vm298 = vcmp.ne.s32.totalorder %v290, 0
      %vm299 = vcmp.ne.s32.totalorder %v297, 0
      %vm300 = vcmp.lt.s32.totalorder %v290, 0
      %vm301 = vcmp.lt.s32.totalorder %v297, 0
      %vm302 = vmand %vm300, %vm298
      %vm303 = vmand %vm301, %vm299
      %v304 = vadd.s32 %v290, 16
      %v305 = vadd.s32 %v297, 16
      %v306 = vsel %vm302, %v304, %v290
      %v307 = vsel %vm303, %v305, %v297
      %v308 = vld [vmem:[%s1] sm:$0xff]
      %311 = vrot.lane.b32.xlu0 %v279, 4
      %v312 = vpop.permute.xlu0 %311
      %313 = vrot.lane.b32.xlu0 %v280, 4
      %v314 = vpop.permute.xlu0 %313
      %vm315 = vcmask 31744
      %v316 = vsel %vm315, %v312, %v314
      %v320 = vsel %vm315, 0.0, %v312
      %v321 = vsel %vm315, %v314, 0.0
      %v322 = vadd.s32 %v306, 4294967292
      %v323 = vadd.s32 %v307, 4294967292
      %vm324 = vcmp.ge.s32.totalorder %v322, 0
      %vm325 = vcmp.ge.s32.totalorder %v323, 0
      %vm326 = vcmp.lt.s32.totalorder %v322, 16
      %vm327 = vcmp.lt.s32.totalorder %v323, 16
      %vm328 = vmand %vm324, %vm326
      %vm329 = vmand %vm325, %vm327
      %v330 = vsel %vm328, 1, 0
      %v331 = vsel %vm329, 1, 0
      %vm332 = vcmp.eq.s32.totalorder %v330, 1
      %vm333 = vcmp.eq.s32.totalorder %v331, 1
      %v334 = vsel %vm332, %v320, 0.0
      %v335 = vsel %vm333, %v316, 0.0
      %v336 = vadd.s32 %v306, 4294967293
      %v337 = vadd.s32 %v307, 4294967293
      %vm338 = vcmp.ge.s32.totalorder %v336, 0
      %vm339 = vcmp.ge.s32.totalorder %v337, 0
      %vm340 = vcmp.lt.s32.totalorder %v336, 16
      %vm341 = vcmp.lt.s32.totalorder %v337, 16
      %vm342 = vmand %vm338, %vm340
      %vm343 = vmand %vm339, %vm341
      %v344 = vsel %vm342, 1, 0
      %v345 = vsel %vm343, 1, 0
      %vm346 = vcmp.eq.s32.totalorder %v344, 1
      %vm347 = vcmp.eq.s32.totalorder %v345, 1
      %350 = vrot.lane.b32.xlu0 %v320, 127
      %v351 = vpop.permute.xlu0 %350
      %352 = vrot.lane.b32.xlu0 %v316, 127
      %v353 = vpop.permute.xlu0 %352
      %354 = vrot.lane.b32.xlu0 %v321, 127
      %v355 = vpop.permute.xlu0 %354
      %vm356 = vcmask 1039360
      %v357 = vsel %vm356, %v351, %v353
      %v358 = vsel %vm356, %v353, %v355
      %v361 = vsel %vm346, %v357, 0.0
      %v362 = vsel %vm347, %v358, 0.0
      %v363 = vadd.s32 %v306, 4294967294
      %v364 = vadd.s32 %v307, 4294967294
      %vm365 = vcmp.ge.s32.totalorder %v363, 0
      %vm366 = vcmp.ge.s32.totalorder %v364, 0
      %vm367 = vcmp.lt.s32.totalorder %v363, 16
      %vm368 = vcmp.lt.s32.totalorder %v364, 16
      %vm369 = vmand %vm365, %vm367
      %vm370 = vmand %vm366, %vm368
      %v371 = vsel %vm369, 1, 0
      %v372 = vsel %vm370, 1, 0
      %vm373 = vcmp.eq.s32.totalorder %v371, 1
      %vm374 = vcmp.eq.s32.totalorder %v372, 1
      %375 = vrot.lane.b32.xlu0 %v320, 126
      %v376 = vpop.permute.xlu0 %375
      %377 = vrot.lane.b32.xlu0 %v316, 126
      %v378 = vpop.permute.xlu0 %377
      %379 = vrot.lane.b32.xlu0 %v321, 126
      %v380 = vpop.permute.xlu0 %379
      %vm381 = vcmask 1031168
      %v382 = vsel %vm381, %v376, %v378
      %v383 = vsel %vm381, %v378, %v380
      %v386 = vsel %vm373, %v382, 0.0
      %v387 = vsel %vm374, %v383, 0.0
      %v388 = vadd.s32 %v306, 4294967295
      %v389 = vadd.s32 %v307, 4294967295
      %vm390 = vcmp.ge.s32.totalorder %v388, 0
      %vm391 = vcmp.ge.s32.totalorder %v389, 0
      %vm392 = vcmp.lt.s32.totalorder %v388, 16
      %vm393 = vcmp.lt.s32.totalorder %v389, 16
      %vm394 = vmand %vm390, %vm392
      %vm395 = vmand %vm391, %vm393
      %v396 = vsel %vm394, 1, 0
      %v397 = vsel %vm395, 1, 0
      %vm398 = vcmp.eq.s32.totalorder %v396, 1
      %vm399 = vcmp.eq.s32.totalorder %v397, 1
      %400 = vrot.lane.b32.xlu0 %v320, 125
      %v401 = vpop.permute.xlu0 %400
      %402 = vrot.lane.b32.xlu0 %v316, 125
      %v403 = vpop.permute.xlu0 %402
      %404 = vrot.lane.b32.xlu0 %v321, 125
      %v405 = vpop.permute.xlu0 %404
      %vm406 = vcmask 1022976
      %v407 = vsel %vm406, %v401, %v403
      %v408 = vsel %vm406, %v403, %v405
      %v411 = vsel %vm398, %v407, 0.0
      %v412 = vsel %vm399, %v408, 0.0
      %v413 = vadd.s32 %v306, 1
      %v414 = vadd.s32 %v307, 1
      %vm415 = vcmp.ge.s32.totalorder %v413, 0
      %vm416 = vcmp.ge.s32.totalorder %v414, 0
      %vm417 = vcmp.lt.s32.totalorder %v413, 16
      %vm418 = vcmp.lt.s32.totalorder %v414, 16
      %vm419 = vmand %vm415, %vm417
      %vm420 = vmand %vm416, %vm418
      %v421 = vsel %vm419, 1, 0
      %v422 = vsel %vm420, 1, 0
      %vm423 = vcmp.eq.s32.totalorder %v421, 1
      %vm424 = vcmp.eq.s32.totalorder %v422, 1
      %425 = vrot.lane.b32.xlu0 %v320, 123
      %v426 = vpop.permute.xlu0 %425
      %427 = vrot.lane.b32.xlu0 %v316, 123
      %v428 = vpop.permute.xlu0 %427
      %429 = vrot.lane.b32.xlu0 %v321, 123
      %v430 = vpop.permute.xlu0 %429
      %vm431 = vcmask 1006592
      %v432 = vsel %vm431, %v426, %v428
      %v433 = vsel %vm431, %v428, %v430
      %v436 = vsel %vm423, %v432, 0.0
      %v437 = vsel %vm424, %v433, 0.0
      %v438 = vadd.s32 %v306, 2
      %v439 = vadd.s32 %v307, 2
      %vm440 = vcmp.ge.s32.totalorder %v438, 0
      %vm441 = vcmp.ge.s32.totalorder %v439, 0
      %vm442 = vcmp.lt.s32.totalorder %v438, 16
      %vm443 = vcmp.lt.s32.totalorder %v439, 16
      %vm444 = vmand %vm440, %vm442
      %vm445 = vmand %vm441, %vm443
      %v446 = vsel %vm444, 1, 0
      %v447 = vsel %vm445, 1, 0
      %vm448 = vcmp.eq.s32.totalorder %v446, 1
      %vm449 = vcmp.eq.s32.totalorder %v447, 1
      %450 = vrot.lane.b32.xlu0 %v320, 122
      %v451 = vpop.permute.xlu0 %450
      %452 = vrot.lane.b32.xlu0 %v316, 122
      %v453 = vpop.permute.xlu0 %452
      %454 = vrot.lane.b32.xlu0 %v321, 122
      %v455 = vpop.permute.xlu0 %454
      %vm456 = vcmask 998400
      %v457 = vsel %vm456, %v451, %v453
      %v458 = vsel %vm456, %v453, %v455
      %v461 = vsel %vm448, %v457, 0.0
      %v462 = vsel %vm449, %v458, 0.0
      %v463 = vadd.s32 %v306, 3
      %v464 = vadd.s32 %v307, 3
      %vm465 = vcmp.ge.s32.totalorder %v463, 0
      %vm466 = vcmp.ge.s32.totalorder %v464, 0
      %vm467 = vcmp.lt.s32.totalorder %v463, 16
      %vm468 = vcmp.lt.s32.totalorder %v464, 16
      %vm469 = vmand %vm465, %vm467
      %vm470 = vmand %vm466, %vm468
      %v471 = vsel %vm469, 1, 0
      %v472 = vsel %vm470, 1, 0
      %vm473 = vcmp.eq.s32.totalorder %v471, 1
      %vm474 = vcmp.eq.s32.totalorder %v472, 1
      %475 = vrot.lane.b32.xlu0 %v320, 121
      %v476 = vpop.permute.xlu0 %475
      %477 = vrot.lane.b32.xlu0 %v316, 121
      %v478 = vpop.permute.xlu0 %477
      %479 = vrot.lane.b32.xlu0 %v321, 121
      %v480 = vpop.permute.xlu0 %479
      %vm481 = vcmask 990208
      %v482 = vsel %vm481, %v476, %v478
      %v483 = vsel %vm481, %v478, %v480
      %v486 = vsel %vm473, %v482, 0.0
      %v487 = vsel %vm474, %v483, 0.0
      %v488 = vadd.s32 %v306, 4
      %v489 = vadd.s32 %v307, 4
      %vm490 = vcmp.ge.s32.totalorder %v488, 0
      %vm491 = vcmp.ge.s32.totalorder %v489, 0
      %vm492 = vcmp.lt.s32.totalorder %v488, 16
      %vm493 = vcmp.lt.s32.totalorder %v489, 16
      %vm494 = vmand %vm490, %vm492
      %vm495 = vmand %vm491, %vm493
      %v496 = vsel %vm494, 1, 0
      %v497 = vsel %vm495, 1, 0
      %vm498 = vcmp.eq.s32.totalorder %v496, 1
      %vm499 = vcmp.eq.s32.totalorder %v497, 1
      %500 = vrot.lane.b32.xlu0 %v320, 120
      %v501 = vpop.permute.xlu0 %500
      %502 = vrot.lane.b32.xlu0 %v316, 120
      %v503 = vpop.permute.xlu0 %502
      %504 = vrot.lane.b32.xlu0 %v321, 120
      %v505 = vpop.permute.xlu0 %504
      %vm506 = vcmask 982016
      %v507 = vsel %vm506, %v501, %v503
      %v508 = vsel %vm506, %v503, %v505
      %v511 = vsel %vm498, %v507, 0.0
      %v512 = vsel %vm499, %v508, 0.0
      %513 = vrot.lane.b32.xlu0 %v320, 124
      %v514 = vpop.permute.xlu0 %513
      %515 = vrot.lane.b32.xlu0 %v316, 124
      %v516 = vpop.permute.xlu0 %515
      %517 = vrot.lane.b32.xlu0 %v321, 124
      %v518 = vpop.permute.xlu0 %517
      %vm519 = vcmask 1014784
      %v520 = vsel %vm519, %v514, %v516
      %v521 = vsel %vm519, %v516, %v518
      %v524 = vld [vmem:[%s2] sm:$0xff]
      %526 = vset.pattern.permute.xlu0 0
      %527 = vperm.xlu0 %526, %v524
      %v528 = vpop.permute.xlu0 %527
      %vm530 = vcmask 588800
      %v532 = vsel %vm530, %v308, 0
      %534 = vmatpush.msra.mxu0 0.0
      %535 = vmatpush.msra.mxu0 0.0
      %536 = vmatpush.msra.mxu0 0.0
      %537 = vmatpush.msra.mxu0 0.0
      %538 = vmatpush.msra.mxu0 0.0
      %539 = vmatpush.msra.mxu0 0.0
      %540 = vmatpush.msra.mxu0 0.0
      %541 = vmatpush.msra.mxu0 %v511
      %542 = vmatpush.msra.mxu0 %v486
      %543 = vmatpush.msra.mxu0 %v461
      %544 = vmatpush.msra.mxu0 %v436
      %545 = vmatpush.msra.mxu0 %v520
      %546 = vmatpush.msra.mxu0 %v411
      %547 = vmatpush.msra.mxu0 %v386
      %548 = vmatpush.msra.mxu0 %v361
      %549 = vmatpush.msra.mxu0 %v334
      %550 = vmatmul.f32.gmra.mxu0 %v532
      %v551 = vpop.f32.mrf.mxu0
      %v552 = vadd.f32 %v528, %v551
      %553 = vdwg.mxu0
      %554 = vmatpush.msra.mxu0 0.0
      %555 = vmatpush.msra.mxu0 0.0
      %556 = vmatpush.msra.mxu0 0.0
      %557 = vmatpush.msra.mxu0 0.0
      %558 = vmatpush.msra.mxu0 0.0
      %559 = vmatpush.msra.mxu0 0.0
      %560 = vmatpush.msra.mxu0 0.0
      %561 = vmatpush.msra.mxu0 %v512
      %562 = vmatpush.msra.mxu0 %v487
      %563 = vmatpush.msra.mxu0 %v462
      %564 = vmatpush.msra.mxu0 %v437
      %565 = vmatpush.msra.mxu0 %v521
      %566 = vmatpush.msra.mxu0 %v412
      %567 = vmatpush.msra.mxu0 %v387
      %568 = vmatpush.msra.mxu0 %v362
      %569 = vmatpush.msra.mxu0 %v335
      %570 = vmatmul.f32.gmra.mxu0 %v532
      %v571 = vpop.f32.mrf.mxu0
      %v572 = vadd.f32 %v528, %v571
      %573 = vdwg.mxu0
      %v574 = vsub.f32 0.0, %v552
      %v575 = vsub.f32 0.0, %v572
      %v576 = vmin.f32 %v574, 80.0
      %v577 = vmin.f32 %v575, 80.0
      %v578 = vmul.f32 %v576, 1.442695
      %v579 = vpow.pop %v578
      %v580 = vmul.f32 %v577, 1.442695
      %v581 = vpow.pop %v580
      %v582 = vadd.f32 %v579, 1.0
      %v583 = vadd.f32 %v581, 1.0
      %v584 = vrcp.pop %v582
      %v585 = vrcp.pop %v583
      %v586 = vmul.f32 %v582, %v584
      %v587 = vmul.f32 %v583, %v585
      %v588 = vsub.f32 2.0, %v586
      %v589 = vsub.f32 2.0, %v587
      %v590 = vmul.f32 %v584, %v588
      %v591 = vmul.f32 %v585, %v589
      %v592 = vmul.f32 %v552, %v590
      %v593 = vmul.f32 %v572, %v591
      %v594 = vld [vmem:[%s3] sm:$0xff]
      %597 = vrot.lane.b32.xlu0 %v592, 64
      %v598 = vpop.permute.xlu0 %597
      %599 = vrot.lane.b32.xlu0 %v593, 64
      %v600 = vpop.permute.xlu0 %599
      %vm601 = vcmask 523264
      %v602 = vsel %vm601, %v598, %v600
      %v606 = vsel %vm601, 0.0, %v598
      %v607 = vsel %vm601, %v600, 0.0
      %610 = vrot.lane.b32.xlu0 %v606, 112
      %v611 = vpop.permute.xlu0 %610
      %612 = vrot.lane.b32.xlu0 %v602, 112
      %v613 = vpop.permute.xlu0 %612
      %614 = vrot.lane.b32.xlu0 %v607, 112
      %v615 = vpop.permute.xlu0 %614
      %vm616 = vcmask 916480
      %v617 = vsel %vm616, %v611, %v613
      %v618 = vsel %vm616, %v613, %v615
      %621 = vrot.lane.b32.xlu0 %v606, 96
      %v622 = vpop.permute.xlu0 %621
      %623 = vrot.lane.b32.xlu0 %v602, 96
      %v624 = vpop.permute.xlu0 %623
      %625 = vrot.lane.b32.xlu0 %v607, 96
      %v626 = vpop.permute.xlu0 %625
      %vm627 = vcmask 785408
      %v628 = vsel %vm627, %v622, %v624
      %v629 = vsel %vm627, %v624, %v626
      %632 = vrot.lane.b32.xlu0 %v606, 80
      %v633 = vpop.permute.xlu0 %632
      %634 = vrot.lane.b32.xlu0 %v602, 80
      %v635 = vpop.permute.xlu0 %634
      %636 = vrot.lane.b32.xlu0 %v607, 80
      %v637 = vpop.permute.xlu0 %636
      %vm638 = vcmask 654336
      %v639 = vsel %vm638, %v633, %v635
      %v640 = vsel %vm638, %v635, %v637
      %643 = vrot.lane.b32.xlu0 %v606, 64
      %v644 = vpop.permute.xlu0 %643
      %645 = vrot.lane.b32.xlu0 %v602, 64
      %v646 = vpop.permute.xlu0 %645
      %647 = vrot.lane.b32.xlu0 %v607, 64
      %v648 = vpop.permute.xlu0 %647
      %v649 = vsel %vm601, %v644, %v646
      %v650 = vsel %vm601, %v646, %v648
      %653 = vrot.lane.b32.xlu0 %v606, 48
      %v654 = vpop.permute.xlu0 %653
      %655 = vrot.lane.b32.xlu0 %v602, 48
      %v656 = vpop.permute.xlu0 %655
      %657 = vrot.lane.b32.xlu0 %v607, 48
      %v658 = vpop.permute.xlu0 %657
      %vm659 = vcmask 392192
      %v660 = vsel %vm659, %v654, %v656
      %v661 = vsel %vm659, %v656, %v658
      %664 = vrot.lane.b32.xlu0 %v606, 32
      %v665 = vpop.permute.xlu0 %664
      %666 = vrot.lane.b32.xlu0 %v602, 32
      %v667 = vpop.permute.xlu0 %666
      %668 = vrot.lane.b32.xlu0 %v607, 32
      %v669 = vpop.permute.xlu0 %668
      %vm670 = vcmask 261120
      %v671 = vsel %vm670, %v665, %v667
      %v672 = vsel %vm670, %v667, %v669
      %675 = vrot.lane.b32.xlu0 %v606, 16
      %v676 = vpop.permute.xlu0 %675
      %677 = vrot.lane.b32.xlu0 %v602, 16
      %v678 = vpop.permute.xlu0 %677
      %679 = vrot.lane.b32.xlu0 %v607, 16
      %v680 = vpop.permute.xlu0 %679
      %vm681 = vcmask 130048
      %v682 = vsel %vm681, %v676, %v678
      %v683 = vsel %vm681, %v678, %v680
      %v686 = vld [vmem:[%s4] sm:$0xff]
      %688 = vset.pattern.permute.xlu0 0
      %689 = vperm.xlu0 %688, %v686
      %v690 = vpop.permute.xlu0 %689
      %v693 = vsel %vm530, %v594, 0
      %695 = vmatpush.msra.mxu0 0.0
      %696 = vmatpush.msra.mxu0 0.0
      %697 = vmatpush.msra.mxu0 0.0
      %698 = vmatpush.msra.mxu0 0.0
      %699 = vmatpush.msra.mxu0 0.0
      %700 = vmatpush.msra.mxu0 0.0
      %701 = vmatpush.msra.mxu0 0.0
      %702 = vmatpush.msra.mxu0 %v602
      %703 = vmatpush.msra.mxu0 %v682
      %704 = vmatpush.msra.mxu0 %v671
      %705 = vmatpush.msra.mxu0 %v660
      %706 = vmatpush.msra.mxu0 %v649
      %707 = vmatpush.msra.mxu0 %v639
      %708 = vmatpush.msra.mxu0 %v628
      %709 = vmatpush.msra.mxu0 %v617
      %710 = vmatpush.msra.mxu0 %v606
      %711 = vmatmul.f32.gmra.mxu0 %v693
      %v712 = vpop.f32.mrf.mxu0
      %v713 = vadd.f32 %v690, %v712
      %714 = vdwg.mxu0
      %715 = vmatpush.msra.mxu0 0.0
      %716 = vmatpush.msra.mxu0 0.0
      %717 = vmatpush.msra.mxu0 0.0
      %718 = vmatpush.msra.mxu0 0.0
      %719 = vmatpush.msra.mxu0 0.0
      %720 = vmatpush.msra.mxu0 0.0
      %721 = vmatpush.msra.mxu0 0.0
      %722 = vmatpush.msra.mxu0 %v607
      %723 = vmatpush.msra.mxu0 %v683
      %724 = vmatpush.msra.mxu0 %v672
      %725 = vmatpush.msra.mxu0 %v661
      %726 = vmatpush.msra.mxu0 %v650
      %727 = vmatpush.msra.mxu0 %v640
      %728 = vmatpush.msra.mxu0 %v629
      %729 = vmatpush.msra.mxu0 %v618
      %730 = vmatpush.msra.mxu0 %v602
      %731 = vmatmul.f32.gmra.mxu0 %v693
      %v732 = vpop.f32.mrf.mxu0
      %v733 = vadd.f32 %v690, %v732
      %734 = vdwg.mxu0
      %v735 = vsub.f32 0.0, %v713
      %v736 = vsub.f32 0.0, %v733
      %v737 = vmin.f32 %v735, 80.0
      %v738 = vmin.f32 %v736, 80.0
      %v739 = vmul.f32 %v737, 1.442695
      %v740 = vpow.pop %v739
      %v741 = vmul.f32 %v738, 1.442695
      %v742 = vpow.pop %v741
      %v743 = vadd.f32 %v740, 1.0
      %v744 = vadd.f32 %v742, 1.0
      %v745 = vrcp.pop %v743
      %v746 = vrcp.pop %v744
      %v747 = vmul.f32 %v743, %v745
      %v748 = vmul.f32 %v744, %v746
      %v749 = vsub.f32 2.0, %v747
      %v750 = vsub.f32 2.0, %v748
      %v751 = vmul.f32 %v745, %v749
      %v752 = vmul.f32 %v746, %v750
      %v753 = vmul.f32 %v713, %v751
      %v754 = vmul.f32 %v733, %v752
      %v755 = vld [vmem:[%s5] sm:$0xff]
      %v756 = vld [vmem:[%s5 + $0x8] sm:$0xff]
      %v757 = vld [vmem:[%s6] sm:$0xff]
      %v758 = vld [vmem:[%s6 + $0x8] sm:$0xff]
      %760 = vset.pattern.permute.xlu0 0
      %761 = vperm.xlu0 %760, %v757
      %v762 = vpop.permute.xlu0 %761
      %765 = vset.pattern.permute.xlu0 0
      %766 = vperm.xlu0 %765, %v758
      %v767 = vpop.permute.xlu0 %766
      %v770 = vsel %vm681, %v755, 0
      %v773 = vsel %vm681, %v756, 0
      %775 = vmatpush.msra.mxu0 0.0
      %776 = vmatpush.msra.mxu0 0.0
      %777 = vmatpush.msra.mxu0 0.0
      %778 = vmatpush.msra.mxu0 0.0
      %779 = vmatpush.msra.mxu0 0.0
      %780 = vmatpush.msra.mxu0 0.0
      %781 = vmatpush.msra.mxu0 0.0
      %782 = vmatpush.msra.mxu0 0.0
      %783 = vmatpush.msra.mxu0 0.0
      %784 = vmatpush.msra.mxu0 0.0
      %785 = vmatpush.msra.mxu0 0.0
      %786 = vmatpush.msra.mxu0 0.0
      %787 = vmatpush.msra.mxu0 0.0
      %788 = vmatpush.msra.mxu0 0.0
      %789 = vmatpush.msra.mxu0 %v753
      %790 = vmatpush.msra.mxu0 %v279
      %791 = vmatmul.f32.gmra.mxu0 %v770
      %v792 = vpop.f32.mrf.mxu0
      %v793 = vadd.f32 %v762, %v792
      %794 = vmatmul.f32.gmra.mxu0 %v773
      %v795 = vpop.f32.mrf.mxu0
      %v796 = vadd.f32 %v767, %v795
      %797 = vdwg.mxu0
      %798 = vmatpush.msra.mxu0 0.0
      %799 = vmatpush.msra.mxu0 0.0
      %800 = vmatpush.msra.mxu0 0.0
      %801 = vmatpush.msra.mxu0 0.0
      %802 = vmatpush.msra.mxu0 0.0
      %803 = vmatpush.msra.mxu0 0.0
      %804 = vmatpush.msra.mxu0 0.0
      %805 = vmatpush.msra.mxu0 0.0
      %806 = vmatpush.msra.mxu0 0.0
      %807 = vmatpush.msra.mxu0 0.0
      %808 = vmatpush.msra.mxu0 0.0
      %809 = vmatpush.msra.mxu0 0.0
      %810 = vmatpush.msra.mxu0 0.0
      %811 = vmatpush.msra.mxu0 0.0
      %812 = vmatpush.msra.mxu0 %v754
      %813 = vmatpush.msra.mxu0 %v280
      %814 = vmatmul.f32.gmra.mxu0 %v770
      %v815 = vpop.f32.mrf.mxu0
      %v816 = vadd.f32 %v762, %v815
      %817 = vmatmul.f32.gmra.mxu0 %v773
      %v818 = vpop.f32.mrf.mxu0
      %v819 = vadd.f32 %v767, %v818
      %820 = vdwg.mxu0
      %v821 = vsub.f32 0.0, %v793
      %v822 = vsub.f32 0.0, %v816
      %v823 = vsub.f32 0.0, %v796
      %v824 = vsub.f32 0.0, %v819
      %v825 = vmin.f32 %v821, 80.0
      %v826 = vmin.f32 %v822, 80.0
      %v827 = vmin.f32 %v823, 80.0
      %v828 = vmin.f32 %v824, 80.0
      %v829 = vmul.f32 %v825, 1.442695
      %v830 = vpow.pop %v829
      %v831 = vmul.f32 %v826, 1.442695
      %v832 = vpow.pop %v831
      %v833 = vmul.f32 %v827, 1.442695
      %v834 = vpow.pop %v833
      %v835 = vmul.f32 %v828, 1.442695
      %v836 = vpow.pop %v835
      %v837 = vadd.f32 %v830, 1.0
      %v838 = vadd.f32 %v832, 1.0
      %v839 = vadd.f32 %v834, 1.0
      %v840 = vadd.f32 %v836, 1.0
      %v841 = vrcp.pop %v837
      %v842 = vrcp.pop %v838
      %v843 = vrcp.pop %v839
      %v844 = vrcp.pop %v840
      %v845 = vmul.f32 %v837, %v841
      %v846 = vmul.f32 %v838, %v842
      %v847 = vmul.f32 %v839, %v843
      %v848 = vmul.f32 %v840, %v844
      %v849 = vsub.f32 2.0, %v845
      %v850 = vsub.f32 2.0, %v846
      %v851 = vsub.f32 2.0, %v847
      %v852 = vsub.f32 2.0, %v848
      %v853 = vmul.f32 %v841, %v849
      %v854 = vmul.f32 %v842, %v850
      %v855 = vmul.f32 %v843, %v851
      %v856 = vmul.f32 %v844, %v852
      %v857 = vmul.f32 %v793, %v853
      %v858 = vmul.f32 %v816, %v854
      %v859 = vmul.f32 %v796, %v855
      %v860 = vmul.f32 %v819, %v856
      %861 = vst [vmem:[%s278] sm:$0xff] %v857
      %862 = vst [vmem:[%s278 + $0x8] sm:$0xff] %v858
      %863 = vst [vmem:[%s278 + $0x10] sm:$0xff] %v859
      %864 = vst [vmem:[%s278 + $0x18] sm:$0xff] %v860
      %p865 = scmp.lt.s32.totalorder %s18, 1
      %s866 = scalar_select %p865, %s18, 1
      %s867 = smul.addr %s866, 4
      %s868 = smul.addr %s867, 8
      %s869 = scalar_lea.vmem %s7, %s868
      // Predicated region
      $region49: #{spc_forward.1} parent=47 // pred_check
        %p870 = pneg %p188
      $region50: #{spc_forward.1} parent=47 // pred_check_branch
        %872 = sbr.rel (%p870) target = $region52
      $region51: #{spc_forward.1} parent=47 // pred_region
        _
      $region52: #{spc_forward.1} parent=47 // pred_fallthru
        _
    $region48: #{spc_forward.1} parent=5 // pred_fallthru
      _
    %p873 = scmp.le.s32.totalorder 2, %s13
    // Predicated region
    $region53: #{spc_forward.1} parent=5 // pred_check
      %p874 = pneg %p873
    $region54: #{spc_forward.1} parent=5 // pred_check_branch
      %876 = sbr.rel (%p874) target = $region56
    $region55: #{spc_forward.1} parent=5 // pred_region
      %s877 = ssub.s32 %s13, 2
      // Predicated region
      $region57: #{spc_forward.1} parent=55 // pred_check
        %p878 = pneg %p194
      $region58: #{spc_forward.1} parent=55 // pred_check_branch
        %880 = sbr.rel (%p878) target = $region60
      $region59: #{spc_forward.1} parent=55 // pred_region
        %p881 = scmp.lt.s32.totalorder %s19, 1
        %s882 = scalar_select %p881, %s19, 1
        %s883 = smul.addr %s882, 4
        %s884 = smul.addr %s883, 8
        %s885 = scalar_lea.vmem %s7, %s884
      $region60: #{spc_forward.1} parent=55 // pred_fallthru
        _
    $region56: #{spc_forward.1} parent=5 // pred_fallthru
      _
  $region6: #{spc_forward.1} parent=0 // loop_footer
    %s17 = sadd.s32 1, %s13
  $region7: #{spc_forward.1} parent=0 // loop_footer_branch
    %12 = sbr.rel target = $region3
  $region8: #{spc_forward.1} parent=0 // loop_exit
    _

</llo_original>
